<compile_context>
chip_gen: v7x
topology: tpu7x:2x2x1
jax: 0.10.0
libtpu: 0.0.40
codegen_flags: <defaults>
</compile_context>

<pallas_src>
import jax
import jax.numpy as jnp
from jax.experimental import pallas as pl
from jax.experimental.pallas import tpu as pltpu


def _round_up(n, m):
    return ((n + m - 1) // m) * m


def _mlp_kernel(x_ref, w1_ref, b1_ref, w2_ref, b2_ref, w3_ref, b3_ref, o_ref):
    cdt = x_ref.dtype  # compute dtype: f32 (default) or bf16 (flag)
    # Layer 1: contract directly on x's feature axis -> (64, TB). Batch stays
    # on the 128-wide lane axis; no standalone transpose of the (TB, F) tile.
    h1 = jax.lax.dot_general(
        w1_ref[...], x_ref[...],
        dimension_numbers=(((1,), (1,)), ((), ())),
        preferred_element_type=jnp.float32,
    )                                                                    # (64, TB) f32
    h1 = jnp.maximum(h1 + b1_ref[...].astype(jnp.float32), 0.0).astype(cdt)
    h2 = jnp.dot(w2_ref[...], h1, preferred_element_type=jnp.float32)    # (32, TB)
    h2 = jnp.maximum(h2 + b2_ref[...].astype(jnp.float32), 0.0).astype(cdt)
    # TODO(synk): on v5e layer 3 could move to the VPU (broadcast-mul + 32-row
    # reduce) instead of a 1-output-row MXU matmul; skipped since removing the
    # layer-1 transpose already relieves the vector-extended slot.
    y = jnp.dot(w3_ref[...], h2, preferred_element_type=jnp.float32)     # (1, TB)
    o_ref[...] = (y + b3_ref[...].astype(jnp.float32)).astype(o_ref.dtype)  # lane-dense store


def stock_predictor_forward(x, params, *, tb=None, use_bf16=False, x_buffer_count=2):
    """x: (B, F) float32.

    params: PyTorch-Linear-style weights (out, in) and biases (out, 1).
    use_bf16: cast x/weights to bfloat16 (f32 MXU accumulation) — ~3x MXU
      throughput, half the HBM bytes for the streamed x operand; ~1e-3 rel
      error vs the f32 reference, so gate tests with a relaxed tolerance.
    x_buffer_count: pipeline depth for the streamed x tiles (try 3 on v5e).
    """
    w1, b1 = params["w1"], params["b1"]
    w2, b2 = params["w2"], params["b2"]
    w3, b3 = params["w3"], params["b3"]

    B, F = x.shape
    compute_dtype = jnp.bfloat16 if use_bf16 else jnp.float32

    if tb is None:
        # Aim for ~8 grid tiles (>=2 so v7x's two TensorCores both get work),
        # round the tile to a multiple of 128 rows, cap at 8192 so the per-TC
        # working set stays modest (see VMEM math below).
        target_tiles = 8
        tb = max(128, min(8192, _round_up(pl.cdiv(B, target_tiles), 128)))
    num_tiles = pl.cdiv(B, tb)
    b_pad = num_tiles * tb
    if b_pad != B:
        x = jnp.pad(x, ((0, b_pad - B), (0, 0)))  # zero rows; sliced off below

    x = x.astype(compute_dtype)
    w1c, b1c = w1.astype(compute_dtype), b1.astype(compute_dtype)
    w2c, b2c = w2.astype(compute_dtype), b2.astype(compute_dtype)
    w3c, b3c = w3.astype(compute_dtype), b3.astype(compute_dtype)

    # VMEM working set per tile (lane padding counted):
    #   x buffers: tb * round_up(F,128) * itemsize, x_buffer_count deep
    #   intermediates (f32): h1 (64,tb) + h2 (32,tb) + y ((1->8),tb)
    #   re-cast activation copies (compute dtype): (64+32)*tb
    #   output buffers ((1->8),tb f32, double-buffered) + weights (small)
    itemsize = jnp.dtype(compute_dtype).itemsize
    x_buf = tb * _round_up(F, 128) * itemsize
    interm = tb * (64 + 32 + 8) * 4
    act_copies = tb * (64 + 32) * itemsize
    out_buf = tb * 8 * 4
    per_tile = x_buffer_count * x_buf + interm + act_copies + 2 * out_buf + (1 << 20)
    vmem_limit = int(min(48 << 20, max(24 << 20, 2 * per_tile)))

    const2 = lambda i: (0, 0)  # weights/biases: DMA'd once, VMEM-resident
    if x_buffer_count == 2:
        x_spec = pl.BlockSpec((tb, F), lambda i: (i, 0))
    else:
        x_spec = pl.BlockSpec((tb, F), lambda i: (i, 0),
                              pipeline_mode=pl.Buffered(x_buffer_count))

    out = pl.pallas_call(
        _mlp_kernel,
        out_shape=jax.ShapeDtypeStruct((num_tiles, 1, tb), jnp.float32),
        grid=(num_tiles,),
        in_specs=[
            x_spec,                                    # x: streamed batch tiles
            pl.BlockSpec((64, F), const2),             # w1
            pl.BlockSpec((64, 1), const2),             # b1
            pl.BlockSpec((32, 64), const2),            # w2
            pl.BlockSpec((32, 1), const2),             # b2
            pl.BlockSpec((1, 32), const2),             # w3
            pl.BlockSpec((1, 1), const2),              # b3
        ],
        out_specs=pl.BlockSpec((None, 1, tb), lambda i: (i, 0, 0)),
        compiler_params=pltpu.CompilerParams(
            dimension_semantics=("parallel",),  # shard batch tiles across v7x's 2 TCs
            vmem_limit_bytes=vmem_limit,
        ),
    )(x, w1c, b1c, w2c, b2c, w3c, b3c)

    return out.reshape(b_pad, 1)[:B]


def init_params(key, dim_features):
    """Deterministic init mimicking nn.Linear default (uniform +/- 1/sqrt(fan_in)).

    Weights stored as (out, in), biases as (out, 1) — PyTorch orientation,
    exactly what the batch-on-lanes kernel consumes.
    """
    def linear(key, fan_in, fan_out):
        kw, kb = jax.random.split(key)
        bound = 1.0 / jnp.sqrt(jnp.float32(fan_in))
        w = jax.random.uniform(kw, (fan_out, fan_in), jnp.float32, -bound, bound)
        b = jax.random.uniform(kb, (fan_out, 1), jnp.float32, -bound, bound)
        return w, b

    k1, k2, k3 = jax.random.split(key, 3)
    w1, b1 = linear(k1, dim_features, 64)
    w2, b2 = linear(k2, 64, 32)
    w3, b3 = linear(k3, 32, 1)
    return {"w1": w1, "b1": b1, "w2": w2, "b2": b2, "w3": w3, "b3": b3}


def _reference(x, p):
    h1 = jnp.maximum(x @ p["w1"].T + p["b1"].T, 0.0)
    h2 = jnp.maximum(h1 @ p["w2"].T + p["b2"].T, 0.0)
    return h2 @ p["w3"].T + p["b3"].T


if __name__ == "__main__":
    key = jax.random.PRNGKey(0)
    kx, kp = jax.random.split(key)

    batch, dim_features = 8, 16
    x = jax.random.normal(kx, (batch, dim_features), jnp.float32)
    params = init_params(kp, dim_features)
    ref = _reference(x, params)

    # Default f32 path.
    out = jax.block_until_ready(stock_predictor_forward(x, params))
    assert out.shape == (batch, 1)
    assert jnp.allclose(out, ref, atol=1e-5, rtol=1e-4), float(
        jnp.max(jnp.abs(out - ref)))

    # bf16 flag path (MXU-native dtype, relaxed tolerance vs f32 reference).
    out_bf16 = jax.block_until_ready(
        stock_predictor_forward(x, params, use_bf16=True))
    assert out_bf16.shape == (batch, 1)
    assert jnp.allclose(out_bf16, ref, atol=5e-2, rtol=5e-2), float(
        jnp.max(jnp.abs(out_bf16 - ref)))

    # Multi-tile path (grid > 1, exercises streaming + ragged-batch padding).
    batch2 = 300
    x2 = jax.random.normal(kx, (batch2, dim_features), jnp.float32)
    ref2 = _reference(x2, params)
    out2 = jax.block_until_ready(stock_predictor_forward(x2, params, tb=128))
    assert out2.shape == (batch2, 1)
    assert jnp.allclose(out2, ref2, atol=1e-4, rtol=1e-4), float(
        jnp.max(jnp.abs(out2 - ref2)))

    print("KERNEL_OK")
</pallas_src>

<mosaic_0001>
module attributes {stable_mosaic.version = 11 : i64} {
  func.func @_mlp_kernel(%arg0: i32, %arg1: memref<128x16xf32, #tpu.memory_space<vmem>>, %arg2: memref<64x16xf32, #tpu.memory_space<vmem>>, %arg3: memref<64x1xf32, #tpu.memory_space<vmem>>, %arg4: memref<32x64xf32, #tpu.memory_space<vmem>>, %arg5: memref<32x1xf32, #tpu.memory_space<vmem>>, %arg6: memref<1x32xf32, #tpu.memory_space<vmem>>, %arg7: memref<1x1xf32, #tpu.memory_space<vmem>>, %arg8: memref<1x1x128xf32, #tpu.memory_space<vmem>>) attributes {dimension_semantics = [#tpu.dimension_semantics<parallel>], iteration_bounds = array<i64: 1>, scalar_prefetch = 0 : i64, scratch_operands = 0 : i64, tpu.core_type = #tpu.core_type<tc>, window_params = [{transform_indices = @transform_0, window_bounds = array<i64: 128, 16>}, {pipeline_mode = #tpu.pipeline_mode<synchronous>, transform_indices = @transform_1, window_bounds = array<i64: 64, 16>}, {pipeline_mode = #tpu.pipeline_mode<synchronous>, transform_indices = @transform_2, window_bounds = array<i64: 64, 1>}, {pipeline_mode = #tpu.pipeline_mode<synchronous>, transform_indices = @transform_3, window_bounds = array<i64: 32, 64>}, {pipeline_mode = #tpu.pipeline_mode<synchronous>, transform_indices = @transform_4, window_bounds = array<i64: 32, 1>}, {pipeline_mode = #tpu.pipeline_mode<synchronous>, transform_indices = @transform_5, window_bounds = array<i64: 1, 32>}, {pipeline_mode = #tpu.pipeline_mode<synchronous>, transform_indices = @transform_6, window_bounds = array<i64: 1, 1>}, {transform_indices = @transform_7, window_bounds = array<i64: 1, 1, 128>}]} {
    %c0 = arith.constant 0 : index
    %c0_0 = arith.constant 0 : index
    %0 = vector.load %arg2[%c0, %c0_0] : memref<64x16xf32, #tpu.memory_space<vmem>>, vector<64x16xf32>
    %c0_1 = arith.constant 0 : index
    %c0_2 = arith.constant 0 : index
    %1 = vector.load %arg1[%c0_1, %c0_2] : memref<128x16xf32, #tpu.memory_space<vmem>>, vector<128x16xf32>
    %cst = arith.constant dense<0.000000e+00> : vector<64x128xf32>
    %2 = tpu.matmul %0, %1, %cst {dimension_numbers = #tpu.dot_dimension_numbers<[1], [1], [0], [0], [0, 0, 1, 0], [], []>} : vector<64x16xf32>, vector<128x16xf32>, vector<64x128xf32> -> vector<64x128xf32>
    %c0_3 = arith.constant 0 : index
    %c0_4 = arith.constant 0 : index
    %3 = vector.load %arg3[%c0_3, %c0_4] : memref<64x1xf32, #tpu.memory_space<vmem>>, vector<64x1xf32>
    %4 = vector.broadcast %3 : vector<64x1xf32> to vector<64x128xf32>
    %5 = arith.addf %2, %4 : vector<64x128xf32>
    %cst_5 = arith.constant 0.000000e+00 : f32
    %6 = vector.broadcast %cst_5 : f32 to vector<64x128xf32>
    %7 = arith.maximumf %5, %6 : vector<64x128xf32>
    %c0_6 = arith.constant 0 : index
    %c0_7 = arith.constant 0 : index
    %8 = vector.load %arg4[%c0_6, %c0_7] : memref<32x64xf32, #tpu.memory_space<vmem>>, vector<32x64xf32>
    %cst_8 = arith.constant dense<0.000000e+00> : vector<32x128xf32>
    %9 = tpu.matmul %8, %7, %cst_8 {dimension_numbers = #tpu.dot_dimension_numbers<[1], [0], [0], [1], [0, 0, 1, 1], [], []>} : vector<32x64xf32>, vector<64x128xf32>, vector<32x128xf32> -> vector<32x128xf32>
    %c0_9 = arith.constant 0 : index
    %c0_10 = arith.constant 0 : index
    %10 = vector.load %arg5[%c0_9, %c0_10] : memref<32x1xf32, #tpu.memory_space<vmem>>, vector<32x1xf32>
    %11 = vector.broadcast %10 : vector<32x1xf32> to vector<32x128xf32>
    %12 = arith.addf %9, %11 : vector<32x128xf32>
    %cst_11 = arith.constant 0.000000e+00 : f32
    %13 = vector.broadcast %cst_11 : f32 to vector<32x128xf32>
    %14 = arith.maximumf %12, %13 : vector<32x128xf32>
    %c0_12 = arith.constant 0 : index
    %c0_13 = arith.constant 0 : index
    %15 = vector.load %arg6[%c0_12, %c0_13] : memref<1x32xf32, #tpu.memory_space<vmem>>, vector<1x32xf32>
    %cst_14 = arith.constant dense<0.000000e+00> : vector<1x128xf32>
    %16 = tpu.matmul %15, %14, %cst_14 {dimension_numbers = #tpu.dot_dimension_numbers<[1], [0], [0], [1], [0, 0, 1, 1], [], []>} : vector<1x32xf32>, vector<32x128xf32>, vector<1x128xf32> -> vector<1x128xf32>
    %c0_15 = arith.constant 0 : index
    %c0_16 = arith.constant 0 : index
    %17 = vector.load %arg7[%c0_15, %c0_16] : memref<1x1xf32, #tpu.memory_space<vmem>>, vector<1x1xf32>
    %18 = vector.broadcast %17 : vector<1x1xf32> to vector<1x128xf32>
    %19 = arith.addf %16, %18 : vector<1x128xf32>
    %c0_17 = arith.constant 0 : index
    %c0_18 = arith.constant 0 : index
    %c0_19 = arith.constant 0 : index
    %20 = vector.load %arg8[%c0_17, %c0_18, %c0_19] : memref<1x1x128xf32, #tpu.memory_space<vmem>>, vector<1x1x128xf32>
    %21 = vector.shape_cast %20 : vector<1x1x128xf32> to vector<1x128xf32>
    %22 = vector.shape_cast %19 : vector<1x128xf32> to vector<1x1x128xf32>
    tpu.vector_store %arg8[%c0_17, %c0_18, %c0_19], %22 {strides = array<i32>} : memref<1x1x128xf32, #tpu.memory_space<vmem>>, vector<1x1x128xf32>,
    return
  }
  func.func @transform_0(%arg0: i32) -> (i32, i32) {
    %c0_i32 = arith.constant 0 : i32
    %c0_i32_0 = arith.constant 0 : i32
    return %arg0, %c0_i32 : i32, i32
  }
  func.func @transform_1(%arg0: i32) -> (i32, i32) {
    %c0_i32 = arith.constant 0 : i32
    %c0_i32_0 = arith.constant 0 : i32
    %c0_i32_1 = arith.constant 0 : i32
    return %c0_i32, %c0_i32_0 : i32, i32
  }
  func.func @transform_2(%arg0: i32) -> (i32, i32) {
    %c0_i32 = arith.constant 0 : i32
    %c0_i32_0 = arith.constant 0 : i32
    %c0_i32_1 = arith.constant 0 : i32
    return %c0_i32, %c0_i32_0 : i32, i32
  }
  func.func @transform_3(%arg0: i32) -> (i32, i32) {
    %c0_i32 = arith.constant 0 : i32
    %c0_i32_0 = arith.constant 0 : i32
    %c0_i32_1 = arith.constant 0 : i32
    return %c0_i32, %c0_i32_0 : i32, i32
  }
  func.func @transform_4(%arg0: i32) -> (i32, i32) {
    %c0_i32 = arith.constant 0 : i32
    %c0_i32_0 = arith.constant 0 : i32
    %c0_i32_1 = arith.constant 0 : i32
    return %c0_i32, %c0_i32_0 : i32, i32
  }
  func.func @transform_5(%arg0: i32) -> (i32, i32) {
    %c0_i32 = arith.constant 0 : i32
    %c0_i32_0 = arith.constant 0 : i32
    %c0_i32_1 = arith.constant 0 : i32
    return %c0_i32, %c0_i32_0 : i32, i32
  }
  func.func @transform_6(%arg0: i32) -> (i32, i32) {
    %c0_i32 = arith.constant 0 : i32
    %c0_i32_0 = arith.constant 0 : i32
    %c0_i32_1 = arith.constant 0 : i32
    return %c0_i32, %c0_i32_0 : i32, i32
  }
  func.func @transform_7(%arg0: i32) -> (i32, i32, i32) {
    %c0_i32 = arith.constant 0 : i32
    %c0_i32_0 = arith.constant 0 : i32
    %c0_i32_1 = arith.constant 0 : i32
    return %arg0, %c0_i32, %c0_i32_0 : i32, i32, i32
  }
}

</mosaic_0001>

<llo_original>
// kernel: tpu_custom_call.1
$region0: #{tpu_custom_call.1}
  #allocation0 [shape = 'u32[]', space=smem, size = 0x4, offset = 0x4, fixed_abs, tag = 'smem constant byte address 0x4 - core index']
  #allocation1 [shape = 'u32[144,128]{1,0:T(1,128)}', space=vmem, size = 0x12000, scoped, tag = 'internal scratch']
  #allocation2 [shape = 'f32[1,1]{1,0:T(1,128)S(1)}', space=vmem, size = 0x200, scoped, tag = 'scoped memory for tpu_custom_call.1']
  %s0 = inlined_call_operand.vmem [shape: f32[128,16], index: 0, kind: input, shape index: {}]
  %s1 = inlined_call_operand.vmem [shape: f32[64,16], index: 1, kind: input, shape index: {}]
  %s2 = inlined_call_operand.vmem [shape: f32[64,1], index: 2, kind: input, shape index: {}]
  %s3 = inlined_call_operand.vmem [shape: f32[32,64], index: 3, kind: input, shape index: {}]
  %s4 = inlined_call_operand.vmem [shape: f32[32,1], index: 4, kind: input, shape index: {}]
  %s5 = inlined_call_operand.vmem [shape: f32[1,32], index: 5, kind: input, shape index: {}]
  %s6 = inlined_call_operand.<no memory space> [shape: f32[1,1], index: 6, kind: input, shape index: {}]
  %s7 = inlined_call_operand.hbm [shape: f32[1,1,128], index: 7, kind: output, shape index: {}]
  %s8 = sld [smem:[#allocation0]]
  $region38: #{tpu_custom_call.1} parent=0
    _
  %s10 = ssub.s32 1, %s8
  %s11 = scalar_select 0, %s10, %s8
  %v12 = vstv %s6
  %13 = vst [vmem:[#allocation2] sm:$0x1] %v12
  $region1: #{tpu_custom_call.1} parent=0
    #allocation3 [shape = 'u8[512]{0}', space=vmem, size = 0x400, scoped, tag = 'output window, operand 0, single buffered']
    #allocation4 [shape = 's32[1]{0}', space=sflag, size = 0x4, scoped, tag = 'scoped memory for tpu_custom_call.1']
    %14 = vsyncpa [#allocation4], 0
    // Predicated region
    $region2: #{tpu_custom_call.1} parent=1 // pred_check
      _
    $region3: #{tpu_custom_call.1} parent=1 // pred_check_branch
      %16 = sbr.rel (0) target = $region5
    $region4: #{tpu_custom_call.1} parent=1 // pred_region
      _
    $region5: #{tpu_custom_call.1} parent=1 // pred_fallthru
      _
    // Predicated region
    $region6: #{tpu_custom_call.1} parent=1 // pred_check
      _
    $region7: #{tpu_custom_call.1} parent=1 // pred_check_branch
      %18 = sbr.rel (0) target = $region9
    $region8: #{tpu_custom_call.1} parent=1 // pred_region
      _
    $region9: #{tpu_custom_call.1} parent=1 // pred_fallthru
      _
    // Predicated region
    $region10: #{tpu_custom_call.1} parent=1 // pred_check
      _
    $region11: #{tpu_custom_call.1} parent=1 // pred_check_branch
      %20 = sbr.rel (0) target = $region13
    $region12: #{tpu_custom_call.1} parent=1 // pred_region
      _
    $region13: #{tpu_custom_call.1} parent=1 // pred_fallthru
      _
    // Predicated region
    $region14: #{tpu_custom_call.1} parent=1 // pred_check
      _
    $region15: #{tpu_custom_call.1} parent=1 // pred_check_branch
      %22 = sbr.rel (0) target = $region17
    $region16: #{tpu_custom_call.1} parent=1 // pred_region
      _
    $region17: #{tpu_custom_call.1} parent=1 // pred_fallthru
      _
    // Predicated region
    $region18: #{tpu_custom_call.1} parent=1 // pred_check
      _
    $region19: #{tpu_custom_call.1} parent=1 // pred_check_branch
      %24 = sbr.rel (0) target = $region21
    $region20: #{tpu_custom_call.1} parent=1 // pred_region
      _
    $region21: #{tpu_custom_call.1} parent=1 // pred_fallthru
      _
    // Predicated region
    $region22: #{tpu_custom_call.1} parent=1 // pred_check
      _
    $region23: #{tpu_custom_call.1} parent=1 // pred_check_branch
      %26 = sbr.rel (0) target = $region25
    $region24: #{tpu_custom_call.1} parent=1 // pred_region
      _
    $region25: #{tpu_custom_call.1} parent=1 // pred_fallthru
      _
    // Predicated region
    $region26: #{tpu_custom_call.1} parent=1 // pred_check
      _
    $region27: #{tpu_custom_call.1} parent=1 // pred_check_branch
      %28 = sbr.rel (0) target = $region29
    $region28: #{tpu_custom_call.1} parent=1 // pred_region
      _
    $region29: #{tpu_custom_call.1} parent=1 // pred_fallthru
      _
    %v29 = vld [vmem:[%s1] sm:$0xff]
    %v30 = vld [vmem:[%s1 + $0x8] sm:$0xff]
    %v31 = vld [vmem:[%s1 + $0x10] sm:$0xff]
    %v32 = vld [vmem:[%s1 + $0x18] sm:$0xff]
    %v33 = vld [vmem:[%s1 + $0x20] sm:$0xff]
    %v34 = vld [vmem:[%s1 + $0x28] sm:$0xff]
    %v35 = vld [vmem:[%s1 + $0x30] sm:$0xff]
    %v36 = vld [vmem:[%s1 + $0x38] sm:$0xff]
    %v37 = vld [vmem:[%s0] sm:$0xff]
    %v38 = vld [vmem:[%s0 + $0x8] sm:$0xff]
    %v39 = vld [vmem:[%s0 + $0x10] sm:$0xff]
    %v40 = vld [vmem:[%s0 + $0x18] sm:$0xff]
    %v41 = vld [vmem:[%s0 + $0x20] sm:$0xff]
    %v42 = vld [vmem:[%s0 + $0x28] sm:$0xff]
    %v43 = vld [vmem:[%s0 + $0x30] sm:$0xff]
    %v44 = vld [vmem:[%s0 + $0x38] sm:$0xff]
    %v45 = vld [vmem:[%s0 + $0x40] sm:$0xff]
    %v46 = vld [vmem:[%s0 + $0x48] sm:$0xff]
    %v47 = vld [vmem:[%s0 + $0x50] sm:$0xff]
    %v48 = vld [vmem:[%s0 + $0x58] sm:$0xff]
    %v49 = vld [vmem:[%s0 + $0x60] sm:$0xff]
    %v50 = vld [vmem:[%s0 + $0x68] sm:$0xff]
    %v51 = vld [vmem:[%s0 + $0x70] sm:$0xff]
    %v52 = vld [vmem:[%s0 + $0x78] sm:$0xff]
    %v53 = vld [vmem:[%s2] sm:$0xff]
    %v54 = vld [vmem:[%s2 + $0x8] sm:$0xff]
    %v55 = vld [vmem:[%s2 + $0x10] sm:$0xff]
    %v56 = vld [vmem:[%s2 + $0x18] sm:$0xff]
    %v57 = vld [vmem:[%s2 + $0x20] sm:$0xff]
    %v58 = vld [vmem:[%s2 + $0x28] sm:$0xff]
    %v59 = vld [vmem:[%s2 + $0x30] sm:$0xff]
    %v60 = vld [vmem:[%s2 + $0x38] sm:$0xff]
    %62 = vset.pattern.permute.xlu0 0
    %63 = vperm.xlu0 %62, %v53
    %v64 = vpop.permute.xlu0 %63
    %67 = vset.pattern.permute.xlu0 0
    %68 = vperm.xlu0 %67, %v54
    %v69 = vpop.permute.xlu0 %68
    %72 = vset.pattern.permute.xlu0 0
    %73 = vperm.xlu0 %72, %v55
    %v74 = vpop.permute.xlu0 %73
    %77 = vset.pattern.permute.xlu0 0
    %78 = vperm.xlu0 %77, %v56
    %v79 = vpop.permute.xlu0 %78
    %82 = vset.pattern.permute.xlu0 0
    %83 = vperm.xlu0 %82, %v57
    %v84 = vpop.permute.xlu0 %83
    %87 = vset.pattern.permute.xlu0 0
    %88 = vperm.xlu0 %87, %v58
    %v89 = vpop.permute.xlu0 %88
    %92 = vset.pattern.permute.xlu0 0
    %93 = vperm.xlu0 %92, %v59
    %v94 = vpop.permute.xlu0 %93
    %97 = vset.pattern.permute.xlu0 0
    %98 = vperm.xlu0 %97, %v60
    %v99 = vpop.permute.xlu0 %98
    %vm101 = vcmask 130048
    %v103 = vsel %vm101, %v29, 0
    %v106 = vsel %vm101, %v30, 0
    %v109 = vsel %vm101, %v31, 0
    %v112 = vsel %vm101, %v32, 0
    %v115 = vsel %vm101, %v33, 0
    %v118 = vsel %vm101, %v34, 0
    %v121 = vsel %vm101, %v35, 0
    %v124 = vsel %vm101, %v36, 0
    %v127 = vsel %vm101, %v37, 0
    %v130 = vsel %vm101, %v38, 0
    %v133 = vsel %vm101, %v39, 0
    %v136 = vsel %vm101, %v40, 0
    %v139 = vsel %vm101, %v41, 0
    %v142 = vsel %vm101, %v42, 0
    %v145 = vsel %vm101, %v43, 0
    %v148 = vsel %vm101, %v44, 0
    %v151 = vsel %vm101, %v45, 0
    %v154 = vsel %vm101, %v46, 0
    %v157 = vsel %vm101, %v47, 0
    %v160 = vsel %vm101, %v48, 0
    %v163 = vsel %vm101, %v49, 0
    %v166 = vsel %vm101, %v50, 0
    %v169 = vsel %vm101, %v51, 0
    %v172 = vsel %vm101, %v52, 0
    %174 = vmatprep.subr.mxu0 0.0
    %175 = vmatpush1.xpose.msra.mxu0 %v127
    %176 = vmatprep.subr.mxu0 0.0
    %177 = vmatpush1.xpose.msra.mxu0 %v130
    %178 = vmatprep.subr.mxu0 0.0
    %179 = vmatpush1.xpose.msra.mxu0 %v133
    %180 = vmatprep.subr.mxu0 0.0
    %181 = vmatpush1.xpose.msra.mxu0 %v136
    %182 = vmatprep.subr.mxu0 0.0
    %183 = vmatpush1.xpose.msra.mxu0 %v139
    %184 = vmatprep.subr.mxu0 0.0
    %185 = vmatpush1.xpose.msra.mxu0 %v142
    %186 = vmatprep.subr.mxu0 0.0
    %187 = vmatpush1.xpose.msra.mxu0 %v145
    %188 = vmatprep.subr.mxu0 0.0
    %189 = vmatpush1.xpose.msra.mxu0 %v148
    %190 = vmatprep.subr.mxu0 0.0
    %191 = vmatpush1.xpose.msra.mxu0 %v151
    %192 = vmatprep.subr.mxu0 0.0
    %193 = vmatpush1.xpose.msra.mxu0 %v154
    %194 = vmatprep.subr.mxu0 0.0
    %195 = vmatpush1.xpose.msra.mxu0 %v157
    %196 = vmatprep.subr.mxu0 0.0
    %197 = vmatpush1.xpose.msra.mxu0 %v160
    %198 = vmatprep.subr.mxu0 0.0
    %199 = vmatpush1.xpose.msra.mxu0 %v163
    %200 = vmatprep.subr.mxu0 0.0
    %201 = vmatpush1.xpose.msra.mxu0 %v166
    %202 = vmatprep.subr.mxu0 0.0
    %203 = vmatpush1.xpose.msra.mxu0 %v169
    %204 = vmatprep.subr.mxu0 0.0
    %205 = vmatpush1.xpose.msra.mxu0 %v172
    %206 = vmatprep.subr.mxu0 0.0
    %207 = vmatpush1.xpose.msra.mxu0 0.0
    %208 = vmatprep.subr.mxu0 0.0
    %209 = vmatpush1.xpose.msra.mxu0 0.0
    %210 = vmatprep.subr.mxu0 0.0
    %211 = vmatpush1.xpose.msra.mxu0 0.0
    %212 = vmatprep.subr.mxu0 0.0
    %213 = vmatpush1.xpose.msra.mxu0 0.0
    %214 = vmatprep.subr.mxu0 0.0
    %215 = vmatpush1.xpose.msra.mxu0 0.0
    %216 = vmatprep.subr.mxu0 0.0
    %217 = vmatpush1.xpose.msra.mxu0 0.0
    %218 = vmatprep.subr.mxu0 0.0
    %219 = vmatpush1.xpose.msra.mxu0 0.0
    %220 = vmatprep.subr.mxu0 0.0
    %221 = vmatpush1.xpose.msra.mxu0 0.0
    %222 = vmatprep.subr.mxu0 0.0
    %223 = vmatpush1.xpose.msra.mxu0 0.0
    %224 = vmatprep.subr.mxu0 0.0
    %225 = vmatpush1.xpose.msra.mxu0 0.0
    %226 = vmatprep.subr.mxu0 0.0
    %227 = vmatpush1.xpose.msra.mxu0 0.0
    %228 = vmatprep.subr.mxu0 0.0
    %229 = vmatpush1.xpose.msra.mxu0 0.0
    %230 = vmatprep.subr.mxu0 0.0
    %231 = vmatpush1.xpose.msra.mxu0 0.0
    %232 = vmatprep.subr.mxu0 0.0
    %233 = vmatpush1.xpose.msra.mxu0 0.0
    %234 = vmatprep.subr.mxu0 0.0
    %235 = vmatpush1.xpose.msra.mxu0 0.0
    %236 = vmatprep.subr.mxu0 0.0
    %237 = vmatpush1.xpose.msra.mxu0 0.0
    %238 = vmatprep.mubr.f32.mxu0 0.0
    %239 = vmatmul.mubr.f32.gmra.mrb[0].mxu0 %v103
    %v240 = vpop.f32.mrb[0].mxu0
    %v241 = vadd.f32 %v64, %v240
    %v242 = vpop.f32.mrb[0].mxu0
    %243 = vmatprep.mubr.f32.mxu0 0.0
    %244 = vmatmul.mubr.f32.gmra.mrb[0].mxu0 %v106
    %v245 = vpop.f32.mrb[0].mxu0
    %v246 = vadd.f32 %v69, %v245
    %v247 = vpop.f32.mrb[0].mxu0
    %248 = vmatprep.mubr.f32.mxu0 0.0
    %249 = vmatmul.mubr.f32.gmra.mrb[0].mxu0 %v109
    %v250 = vpop.f32.mrb[0].mxu0
    %v251 = vadd.f32 %v74, %v250
    %v252 = vpop.f32.mrb[0].mxu0
    %253 = vmatprep.mubr.f32.mxu0 0.0
    %254 = vmatmul.mubr.f32.gmra.mrb[0].mxu0 %v112
    %v255 = vpop.f32.mrb[0].mxu0
    %v256 = vadd.f32 %v79, %v255
    %v257 = vpop.f32.mrb[0].mxu0
    %258 = vmatprep.mubr.f32.mxu0 0.0
    %259 = vmatmul.mubr.f32.gmra.mrb[0].mxu0 %v115
    %v260 = vpop.f32.mrb[0].mxu0
    %v261 = vadd.f32 %v84, %v260
    %v262 = vpop.f32.mrb[0].mxu0
    %263 = vmatprep.mubr.f32.mxu0 0.0
    %264 = vmatmul.mubr.f32.gmra.mrb[0].mxu0 %v118
    %v265 = vpop.f32.mrb[0].mxu0
    %v266 = vadd.f32 %v89, %v265
    %v267 = vpop.f32.mrb[0].mxu0
    %268 = vmatprep.mubr.f32.mxu0 0.0
    %269 = vmatmul.mubr.f32.gmra.mrb[0].mxu0 %v121
    %v270 = vpop.f32.mrb[0].mxu0
    %v271 = vadd.f32 %v94, %v270
    %v272 = vpop.f32.mrb[0].mxu0
    %273 = vmatprep.mubr.f32.mxu0 0.0
    %274 = vmatmul.mubr.f32.gmra.mrb[0].mxu0 %v124
    %v275 = vpop.f32.mrb[0].mxu0
    %v276 = vadd.f32 %v99, %v275
    %v277 = vpop.f32.mrb[0].mxu0
    %278 = vdwg.mxu0
    %v279 = vmax.f32 %v241, 0.0
    %v280 = vmax.f32 %v246, 0.0
    %v281 = vmax.f32 %v251, 0.0
    %v282 = vmax.f32 %v256, 0.0
    %v283 = vmax.f32 %v261, 0.0
    %v284 = vmax.f32 %v266, 0.0
    %v285 = vmax.f32 %v271, 0.0
    %v286 = vmax.f32 %v276, 0.0
    %v287 = vld [vmem:[%s3] sm:$0xff]
    %v288 = vld [vmem:[%s3 + $0x8] sm:$0xff]
    %v289 = vld [vmem:[%s3 + $0x10] sm:$0xff]
    %v290 = vld [vmem:[%s3 + $0x18] sm:$0xff]
    %v291 = vld [vmem:[%s4] sm:$0xff]
    %v292 = vld [vmem:[%s4 + $0x8] sm:$0xff]
    %v293 = vld [vmem:[%s4 + $0x10] sm:$0xff]
    %v294 = vld [vmem:[%s4 + $0x18] sm:$0xff]
    %296 = vset.pattern.permute.xlu0 0
    %297 = vperm.xlu0 %296, %v291
    %v298 = vpop.permute.xlu0 %297
    %301 = vset.pattern.permute.xlu0 0
    %302 = vperm.xlu0 %301, %v292
    %v303 = vpop.permute.xlu0 %302
    %306 = vset.pattern.permute.xlu0 0
    %307 = vperm.xlu0 %306, %v293
    %v308 = vpop.permute.xlu0 %307
    %311 = vset.pattern.permute.xlu0 0
    %312 = vperm.xlu0 %311, %v294
    %v313 = vpop.permute.xlu0 %312
    %vm315 = vcmask 523264
    %v317 = vsel %vm315, %v287, 0
    %v320 = vsel %vm315, %v288, 0
    %v323 = vsel %vm315, %v289, 0
    %v326 = vsel %vm315, %v290, 0
    %328 = vmatprep.subr.mxu0 0.0
    %329 = vmatpush1.msra.mxu0 %v279
    %330 = vmatprep.subr.mxu0 0.0
    %331 = vmatpush1.msra.mxu0 %v280
    %332 = vmatprep.subr.mxu0 0.0
    %333 = vmatpush1.msra.mxu0 %v281
    %334 = vmatprep.subr.mxu0 0.0
    %335 = vmatpush1.msra.mxu0 %v282
    %336 = vmatprep.subr.mxu0 0.0
    %337 = vmatpush1.msra.mxu0 %v283
    %338 = vmatprep.subr.mxu0 0.0
    %339 = vmatpush1.msra.mxu0 %v284
    %340 = vmatprep.subr.mxu0 0.0
    %341 = vmatpush1.msra.mxu0 %v285
    %342 = vmatprep.subr.mxu0 0.0
    %343 = vmatpush1.msra.mxu0 %v286
    %344 = vmatprep.subr.mxu0 0.0
    %345 = vmatpush1.msra.mxu0 0.0
    %346 = vmatprep.subr.mxu0 0.0
    %347 = vmatpush1.msra.mxu0 0.0
    %348 = vmatprep.subr.mxu0 0.0
    %349 = vmatpush1.msra.mxu0 0.0
    %350 = vmatprep.subr.mxu0 0.0
    %351 = vmatpush1.msra.mxu0 0.0
    %352 = vmatprep.subr.mxu0 0.0
    %353 = vmatpush1.msra.mxu0 0.0
    %354 = vmatprep.subr.mxu0 0.0
    %355 = vmatpush1.msra.mxu0 0.0
    %356 = vmatprep.subr.mxu0 0.0
    %357 = vmatpush1.msra.mxu0 0.0
    %358 = vmatprep.subr.mxu0 0.0
    %359 = vmatpush1.msra.mxu0 0.0
    %360 = vmatprep.subr.mxu0 0.0
    %361 = vmatpush1.msra.mxu0 0.0
    %362 = vmatprep.subr.mxu0 0.0
    %363 = vmatpush1.msra.mxu0 0.0
    %364 = vmatprep.subr.mxu0 0.0
    %365 = vmatpush1.msra.mxu0 0.0
    %366 = vmatprep.subr.mxu0 0.0
    %367 = vmatpush1.msra.mxu0 0.0
    %368 = vmatprep.subr.mxu0 0.0
    %369 = vmatpush1.msra.mxu0 0.0
    %370 = vmatprep.subr.mxu0 0.0
    %371 = vmatpush1.msra.mxu0 0.0
    %372 = vmatprep.subr.mxu0 0.0
    %373 = vmatpush1.msra.mxu0 0.0
    %374 = vmatprep.subr.mxu0 0.0
    %375 = vmatpush1.msra.mxu0 0.0
    %376 = vmatprep.subr.mxu0 0.0
    %377 = vmatpush1.msra.mxu0 0.0
    %378 = vmatprep.subr.mxu0 0.0
    %379 = vmatpush1.msra.mxu0 0.0
    %380 = vmatprep.subr.mxu0 0.0
    %381 = vmatpush1.msra.mxu0 0.0
    %382 = vmatprep.subr.mxu0 0.0
    %383 = vmatpush1.msra.mxu0 0.0
    %384 = vmatprep.subr.mxu0 0.0
    %385 = vmatpush1.msra.mxu0 0.0
    %386 = vmatprep.subr.mxu0 0.0
    %387 = vmatpush1.msra.mxu0 0.0
    %388 = vmatprep.subr.mxu0 0.0
    %389 = vmatpush1.msra.mxu0 0.0
    %390 = vmatprep.subr.mxu0 0.0
    %391 = vmatpush1.msra.mxu0 0.0
    %392 = vmatprep.mubr.f32.mxu0 0.0
    %393 = vmatmul.mubr.f32.gmra.mrb[0].mxu0 %v317
    %v394 = vpop.f32.mrb[0].mxu0
    %v395 = vadd.f32 %v298, %v394
    %v396 = vpop.f32.mrb[0].mxu0
    %397 = vmatprep.mubr.f32.mxu0 0.0
    %398 = vmatmul.mubr.f32.gmra.mrb[0].mxu0 %v320
    %v399 = vpop.f32.mrb[0].mxu0
    %v400 = vadd.f32 %v303, %v399
    %v401 = vpop.f32.mrb[0].mxu0
    %402 = vmatprep.mubr.f32.mxu0 0.0
    %403 = vmatmul.mubr.f32.gmra.mrb[0].mxu0 %v323
    %v404 = vpop.f32.mrb[0].mxu0
    %v405 = vadd.f32 %v308, %v404
    %v406 = vpop.f32.mrb[0].mxu0
    %407 = vmatprep.mubr.f32.mxu0 0.0
    %408 = vmatmul.mubr.f32.gmra.mrb[0].mxu0 %v326
    %v409 = vpop.f32.mrb[0].mxu0
    %v410 = vadd.f32 %v313, %v409
    %v411 = vpop.f32.mrb[0].mxu0
    %412 = vdwg.mxu0
    %v413 = vmax.f32 %v395, 0.0
    %v414 = vmax.f32 %v400, 0.0
    %v415 = vmax.f32 %v405, 0.0
    %v416 = vmax.f32 %v410, 0.0
    %v417 = vld [vmem:[%s5] sm:$0x1]
    %v418 = vld [vmem:[#allocation2] sm:$0x1]
    %420 = vset.pattern.permute.xlu0 0
    %421 = vperm.xlu0 %420, %v418
    %v422 = vpop.permute.xlu0 %421
    %v424 = vlaneseq
    %v425 = vshrl.u32 %v424, 7
    %v426 = vsub.s32 0, %v425
    %v427 = vrot.slane %v422, %v426
    %vm428 = vcmask 261120
    %v430 = vsel %vm428, %v417, 0
    %432 = vmatprep.subr.mxu0 0.0
    %433 = vmatpush1.msra.mxu0 %v413
    %434 = vmatprep.subr.mxu0 0.0
    %435 = vmatpush1.msra.mxu0 %v414
    %436 = vmatprep.subr.mxu0 0.0
    %437 = vmatpush1.msra.mxu0 %v415
    %438 = vmatprep.subr.mxu0 0.0
    %439 = vmatpush1.msra.mxu0 %v416
    %440 = vmatprep.subr.mxu0 0.0
    %441 = vmatpush1.msra.mxu0 0.0
    %442 = vmatprep.subr.mxu0 0.0
    %443 = vmatpush1.msra.mxu0 0.0
    %444 = vmatprep.subr.mxu0 0.0
    %445 = vmatpush1.msra.mxu0 0.0
    %446 = vmatprep.subr.mxu0 0.0
    %447 = vmatpush1.msra.mxu0 0.0
    %448 = vmatprep.subr.mxu0 0.0
    %449 = vmatpush1.msra.mxu0 0.0
    %450 = vmatprep.subr.mxu0 0.0
    %451 = vmatpush1.msra.mxu0 0.0
    %452 = vmatprep.subr.mxu0 0.0
    %453 = vmatpush1.msra.mxu0 0.0
    %454 = vmatprep.subr.mxu0 0.0
    %455 = vmatpush1.msra.mxu0 0.0
    %456 = vmatprep.subr.mxu0 0.0
    %457 = vmatpush1.msra.mxu0 0.0
    %458 = vmatprep.subr.mxu0 0.0
    %459 = vmatpush1.msra.mxu0 0.0
    %460 = vmatprep.subr.mxu0 0.0
    %461 = vmatpush1.msra.mxu0 0.0
    %462 = vmatprep.subr.mxu0 0.0
    %463 = vmatpush1.msra.mxu0 0.0
    %464 = vmatprep.subr.mxu0 0.0
    %465 = vmatpush1.msra.mxu0 0.0
    %466 = vmatprep.subr.mxu0 0.0
    %467 = vmatpush1.msra.mxu0 0.0
    %468 = vmatprep.subr.mxu0 0.0
    %469 = vmatpush1.msra.mxu0 0.0
    %470 = vmatprep.subr.mxu0 0.0
    %471 = vmatpush1.msra.mxu0 0.0
    %472 = vmatprep.subr.mxu0 0.0
    %473 = vmatpush1.msra.mxu0 0.0
    %474 = vmatprep.subr.mxu0 0.0
    %475 = vmatpush1.msra.mxu0 0.0
    %476 = vmatprep.subr.mxu0 0.0
    %477 = vmatpush1.msra.mxu0 0.0
    %478 = vmatprep.subr.mxu0 0.0
    %479 = vmatpush1.msra.mxu0 0.0
    %480 = vmatprep.subr.mxu0 0.0
    %481 = vmatpush1.msra.mxu0 0.0
    %482 = vmatprep.subr.mxu0 0.0
    %483 = vmatpush1.msra.mxu0 0.0
    %484 = vmatprep.subr.mxu0 0.0
    %485 = vmatpush1.msra.mxu0 0.0
    %486 = vmatprep.subr.mxu0 0.0
    %487 = vmatpush1.msra.mxu0 0.0
    %488 = vmatprep.subr.mxu0 0.0
    %489 = vmatpush1.msra.mxu0 0.0
    %490 = vmatprep.subr.mxu0 0.0
    %491 = vmatpush1.msra.mxu0 0.0
    %492 = vmatprep.subr.mxu0 0.0
    %493 = vmatpush1.msra.mxu0 0.0
    %494 = vmatprep.subr.mxu0 0.0
    %495 = vmatpush1.msra.mxu0 0.0
    %496 = vmatprep.mubr.f32.mxu0 0.0
    %497 = vmatmul.mubr.f32.gmra.mrb[0].mxu0 %v430
    %v498 = vpop.f32.mrb[0].mxu0
    %v499 = vadd.f32 %v427, %v498
    %v500 = vpop.f32.mrb[0].mxu0
    %501 = vdwg.mxu0
    %502 = vst [vmem:[#allocation3] sm:$0x1] %v499
    // Predicated region
    $region30: #{tpu_custom_call.1} parent=1 // pred_check
      _
    $region31: #{tpu_custom_call.1} parent=1 // pred_check_branch
      %504 = sbr.rel (0) target = $region33
    $region32: #{tpu_custom_call.1} parent=1 // pred_region
      %s506 = ssub.s32 16, 16
      %507 = vsyncadd [#allocation4], %s506
      %s509 = sshll.u32 [#allocation3], 4
      %s510 = int_to_ptr.vmem [resolvable:$true] %s509
      %512 = dma.vmem_to_hbm [thread:$0]  %s510, 16, %s7, [#allocation4]
    $region33: #{tpu_custom_call.1} parent=1 // pred_fallthru
      _
    // Predicated region
    $region34: #{tpu_custom_call.1} parent=1 // pred_check
      _
    $region35: #{tpu_custom_call.1} parent=1 // pred_check_branch
      %514 = sbr.rel (0) target = $region37
    $region36: #{tpu_custom_call.1} parent=1 // pred_region
      %515 = dma.done [#allocation4], 16
    $region37: #{tpu_custom_call.1} parent=1 // pred_fallthru
      _
    %516 = vsyncpa [#allocation4], 1

</llo_original>
